<compile_context>
chip_gen: v6e
topology: v6e:2x2x1
jax: 0.10.0
libtpu: 0.0.40
codegen_flags: <defaults>
</compile_context>

<pallas_src>
import functools

import jax
import jax.numpy as jnp
from jax.experimental import pallas as pl
from jax.experimental.pallas import tpu as pltpu

_LANES = 128
_SUBLANES = 8


def _mish_kernel(x_ref, o_ref):
    x = x_ref[...]
    xf = x.astype(jnp.float32)
    # mish(x) = x * tanh(softplus(x))
    #         = x * ((1+e^x)^2 - 1) / ((1+e^x)^2 + 1)
    #         = x * t*(t+2) / (t*(t+2) + 2),   t = e^x
    # The t*(t+2) form avoids the (1+t)^2 - 1 cancellation for very negative x.
    # PyTorch F.softplus uses threshold=20 (linear above), and tanh(x>=20) == 1
    # in f32, so select x directly above the threshold.
    t = jnp.exp(jnp.minimum(xf, 20.0))        # single EUP transcendental
    num = t * (t + 2.0)                       # VPU
    den = num + 2.0
    r = pl.reciprocal(den, approx=True)       # EUP vrcp (cheap slot)
    r = r * (2.0 - den * r)                   # one Newton step (VPU) -> ~f32 accurate
    y = xf * num * r
    y = jnp.where(xf > 20.0, xf, y)
    o_ref[...] = y.astype(o_ref.dtype)


@functools.lru_cache(maxsize=None)
def _generation_tuning():
    """Returns (target_tile_bytes, vmem_limit_bytes_or_None, two_tensorcores)."""
    kind = ""
    try:
        kind = jax.devices()[0].device_kind.lower()
    except Exception:  # pragma: no cover - be robust to odd backends
        pass
    if "v7" in kind:
        # 8 MiB tiles; 2 specs x 2 pipeline buffers x 8 MiB = 32 MiB, which is
        # exactly the v7x scoped-VMEM default -> raise it (64 MiB physical).
        return 8 << 20, 48 << 20, True
    if "v6" in kind:
        return 4 << 20, None, False           # 16 MiB footprint < 32 MiB default
    # v5e's scoped-VMEM default is 16 MiB; 2 MiB tiles (8 MiB footprint) are
    # already in the ~85%-of-roofline regime for mem-bound elementwise work.
    return 2 << 20, None, False


def _pick_block_rows(rows: int, target_rows: int, two_cores: bool) -> int:
    """Fixed tile rows; the cdiv grid clamps the ragged last block."""
    tr = max(_SUBLANES, target_rows - target_rows % _SUBLANES)
    if rows <= _SUBLANES:
        return rows                            # one block == full array extent
    if two_cores and rows < 2 * tr:
        # Split small/medium inputs into (at least) two blocks so the
        # "parallel" grid axis can be sharded across both v7x TensorCores.
        half = pl.cdiv(rows, 2)
        half += (-half) % _SUBLANES            # round up to a sublane multiple
        return min(tr, half)
    return min(tr, rows - rows % _SUBLANES)


def _mish_f32(xf):
    """Exact (non-approx) Mish in f32, matching the kernel's clamping."""
    t = jnp.exp(jnp.minimum(xf, 20.0))
    num = t * (t + 2.0)
    y = xf * num / (num + 2.0)
    return jnp.where(xf > 20.0, xf, y)


def mish(x: jax.Array, *, block_rows=None) -> jax.Array:
    """Elementwise Mish via a Pallas TPU kernel. Works for any input shape."""
    if x.size == 0:
        return x
    orig_shape = x.shape
    dtype = x.dtype
    n = x.size

    flat = x.reshape(-1)
    tail = n % _LANES                 # < 128 leftover elements (rare)
    n_main = n - tail

    tile_bytes, vmem_limit, two_cores = _generation_tuning()
    itemsize = jnp.dtype(dtype).itemsize
    if block_rows is None:
        block_rows = max(_SUBLANES, tile_bytes // (_LANES * itemsize))

    out_parts = []
    if n_main:
        rows = n_main // _LANES
        # When tail == 0 this reshape is free (contiguous); otherwise the
        # prefix slice is the only extra copy on the (rare) odd-sized path.
        bulk = flat if tail == 0 else flat[:n_main]
        x2d = bulk.reshape(rows, _LANES)

        tr = _pick_block_rows(rows, block_rows, two_cores)
        grid = (pl.cdiv(rows, tr),)

        cost = pl.CostEstimate(
            flops=9 * n_main,
            transcendentals=2 * n_main,
            bytes_accessed=2 * n_main * itemsize,
        )
        compiler_kwargs = dict(dimension_semantics=("parallel",))
        if vmem_limit is not None:
            compiler_kwargs["vmem_limit_bytes"] = vmem_limit

        out2d = pl.pallas_call(
            _mish_kernel,
            out_shape=jax.ShapeDtypeStruct((rows, _LANES), dtype),
            grid_spec=pl.GridSpec(
                grid=grid,
                in_specs=[pl.BlockSpec((tr, _LANES), lambda i: (i, 0))],
                out_specs=pl.BlockSpec((tr, _LANES), lambda i: (i, 0)),
            ),
            compiler_params=pltpu.CompilerParams(**compiler_kwargs),
            cost_estimate=cost,
        )(x2d)

        if tail == 0:
            return out2d.reshape(orig_shape)
        out_parts.append(out2d.reshape(-1))

    # <128-element ragged tail: tiny jnp epilogue on the last slice only
    # (never a whole-array jnp.pad / [:n] slice).
    # TODO(synk): a manual-DMA (pl.ANY) path could fold the tail into the
    # kernel and avoid the final concatenate copy; not worth it for <128 elems.
    tail_out = _mish_f32(flat[n_main:].astype(jnp.float32)).astype(dtype)
    out_parts.append(tail_out)
    out_flat = out_parts[0] if len(out_parts) == 1 else jnp.concatenate(out_parts)
    return out_flat.reshape(orig_shape)


def _mish_ref(x):
    # Pure-JAX reference matching PyTorch: x * tanh(softplus(x)), threshold=20.
    xf = x.astype(jnp.float32)
    sp = jnp.where(xf > 20.0, xf, jnp.log1p(jnp.exp(jnp.minimum(xf, 20.0))))
    return (xf * jnp.tanh(sp)).astype(x.dtype)


if __name__ == "__main__":
    k0, k1 = jax.random.split(jax.random.PRNGKey(0))

    # NCHW activation (fast path: numel % 128 == 0, no pad, no trailing slice).
    x = jax.random.normal(k0, (2, 4, 16, 16), dtype=jnp.float32)
    y = jax.block_until_ready(mish(x))
    y_ref = _mish_ref(x)
    assert y.shape == x.shape and y.dtype == x.dtype
    assert jnp.allclose(y, y_ref, atol=2e-5, rtol=2e-5)

    # Wide dynamic range (x>20 branch, very negative x) + ragged tail:
    # 1000 = 7*128 + 104 -> bulk via kernel (cdiv grid), tail via jnp epilogue.
    x2 = jnp.linspace(-30.0, 30.0, 1000, dtype=jnp.float32).reshape(10, 100)
    y2 = jax.block_until_ready(mish(x2))
    y2_ref = _mish_ref(x2)
    assert y2.shape == x2.shape and y2.dtype == x2.dtype
    assert jnp.allclose(y2, y2_ref, atol=1e-4, rtol=1e-4)

    # bf16 stays bf16 on the wire; math is done in f32 in-register.
    x3 = jax.random.normal(k1, (2, 4, 16, 16), dtype=jnp.float32).astype(jnp.bfloat16)
    y3 = jax.block_until_ready(mish(x3))
    y3_ref = _mish_ref(x3)
    assert y3.shape == x3.shape and y3.dtype == jnp.bfloat16
    assert jnp.allclose(y3.astype(jnp.float32), y3_ref.astype(jnp.float32),
                        atol=5e-2, rtol=5e-2)

    print("KERNEL_OK")
</pallas_src>

<mosaic_0001>
module attributes {stable_mosaic.version = 11 : i64} {
  func.func @_mish_kernel(%arg0: i32, %arg1: memref<16x128xf32, #tpu.memory_space<vmem>>, %arg2: memref<16x128xf32, #tpu.memory_space<vmem>>) attributes {dimension_semantics = [#tpu.dimension_semantics<parallel>], iteration_bounds = array<i64: 1>, scalar_prefetch = 0 : i64, scratch_operands = 0 : i64, tpu.core_type = #tpu.core_type<tc>, window_params = [{transform_indices = @transform_0, window_bounds = array<i64: 16, 128>}, {transform_indices = @transform_1, window_bounds = array<i64: 16, 128>}]} {
    %c0 = arith.constant 0 : index
    %c0_0 = arith.constant 0 : index
    %0 = vector.load %arg1[%c0, %c0_0] : memref<16x128xf32, #tpu.memory_space<vmem>>, vector<16x128xf32>
    %cst = arith.constant 2.000000e+01 : f32
    %1 = vector.broadcast %cst : f32 to vector<16x128xf32>
    %2 = arith.minimumf %0, %1 : vector<16x128xf32>
    %3 = math.exp %2 : vector<16x128xf32>
    %cst_1 = arith.constant 2.000000e+00 : f32
    %4 = vector.broadcast %cst_1 : f32 to vector<16x128xf32>
    %5 = arith.addf %3, %4 : vector<16x128xf32>
    %6 = arith.mulf %3, %5 : vector<16x128xf32>
    %cst_2 = arith.constant 2.000000e+00 : f32
    %7 = vector.broadcast %cst_2 : f32 to vector<16x128xf32>
    %8 = arith.addf %6, %7 : vector<16x128xf32>
    %9 = tpu.reciprocal %8 {approx = true} : vector<16x128xf32> -> vector<16x128xf32>
    %10 = arith.mulf %8, %9 : vector<16x128xf32>
    %cst_3 = arith.constant 2.000000e+00 : f32
    %11 = vector.broadcast %cst_3 : f32 to vector<16x128xf32>
    %12 = arith.subf %11, %10 : vector<16x128xf32>
    %13 = arith.mulf %9, %12 : vector<16x128xf32>
    %14 = arith.mulf %0, %6 : vector<16x128xf32>
    %15 = arith.mulf %14, %13 : vector<16x128xf32>
    %cst_4 = arith.constant 2.000000e+01 : f32
    %16 = vector.broadcast %cst_4 : f32 to vector<16x128xf32>
    %17 = arith.cmpf ogt, %0, %16 : vector<16x128xf32>
    %18 = arith.select %17, %0, %15 : vector<16x128xi1>, vector<16x128xf32>
    %c0_5 = arith.constant 0 : index
    %c0_6 = arith.constant 0 : index
    %19 = vector.load %arg2[%c0_5, %c0_6] : memref<16x128xf32, #tpu.memory_space<vmem>>, vector<16x128xf32>
    tpu.vector_store %arg2[%c0_5, %c0_6], %18 {strides = array<i32>} : memref<16x128xf32, #tpu.memory_space<vmem>>, vector<16x128xf32>,
    return
  }
  func.func @transform_0(%arg0: i32) -> (i32, i32) {
    %c0_i32 = arith.constant 0 : i32
    %c0_i32_0 = arith.constant 0 : i32
    return %arg0, %c0_i32 : i32, i32
  }
  func.func @transform_1(%arg0: i32) -> (i32, i32) {
    %c0_i32 = arith.constant 0 : i32
    %c0_i32_0 = arith.constant 0 : i32
    return %arg0, %c0_i32 : i32, i32
  }
}

</mosaic_0001>

<llo_original>
// kernel: tpu_custom_call.1
$region0: #{tpu_custom_call.1}
  #allocation0 [shape = 'u32[]', space=smem, size = 0x4, offset = 0x4, fixed_abs, tag = 'smem constant byte address 0x4 - core index']
  #allocation1 [shape = 'u32[144,128]{1,0:T(1,128)}', space=vmem, size = 0x12000, scoped, tag = 'internal scratch']
  %s0 = inlined_call_operand.hbm [shape: f32[16,128], index: 0, kind: input, shape index: {}]
  %s1 = inlined_call_operand.hbm [shape: f32[16,128], index: 1, kind: output, shape index: {}]
  %s2 = sld [smem:[#allocation0]]
  $region18: #{tpu_custom_call.1} parent=0
    _
  %s4 = ssub.s32 1, %s2
  %s5 = scalar_select 0, %s4, %s2
  $region1: #{tpu_custom_call.1} parent=0
    #allocation2 [shape = 'u8[8192]{0}', space=vmem, size = 0x2000, scoped, tag = 'input window, operand 0, single buffered']
    #allocation3 [shape = 's32[1]{0}', space=sflag, size = 0x4, scoped, tag = 'scoped memory for tpu_custom_call.1']
    #allocation4 [shape = 's32[1]{0}', space=sflag, size = 0x4, scoped, tag = 'scoped memory for tpu_custom_call.1']
    #allocation5 [shape = 'u8[8192]{0}', space=vmem, size = 0x2000, scoped, tag = 'output window, operand 0, single buffered']
    %6 = vsyncpa [#allocation3], 0
    %7 = vsyncpa [#allocation4], 0
    // Predicated region
    $region2: #{tpu_custom_call.1} parent=1 // pred_check
      _
    $region3: #{tpu_custom_call.1} parent=1 // pred_check_branch
      %9 = sbr.rel (0) target = $region5
    $region4: #{tpu_custom_call.1} parent=1 // pred_region
      %s11 = ssub.s32 256, 256
      %12 = vsyncadd [#allocation3], %s11
      %s13 = sshll.u32 [#allocation2], 4
      %s14 = int_to_ptr.vmem [resolvable:$true] %s13
      %19 = dma.hbm_to_vmem [thread:$0]  %s0, 256, %s14, [#allocation3], 128, 128, 8
    $region5: #{tpu_custom_call.1} parent=1 // pred_fallthru
      _
    // Predicated region
    $region6: #{tpu_custom_call.1} parent=1 // pred_check
      _
    $region7: #{tpu_custom_call.1} parent=1 // pred_check_branch
      %21 = sbr.rel (0) target = $region9
    $region8: #{tpu_custom_call.1} parent=1 // pred_region
      %22 = dma.done [#allocation3], 256
    $region9: #{tpu_custom_call.1} parent=1 // pred_fallthru
      _
    %v23 = vld [vmem:[#allocation2] sm:$0xff]
    %v24 = vld [vmem:[#allocation2 + $0x8] sm:$0xff]
    %v25 = vmin.f32 %v23, 20.0
    %v26 = vmin.f32 %v24, 20.0
    %v27 = vmul.f32 %v25, 1.442695
    %v28 = vpow.pop %v27
    %v29 = vmul.f32 %v26, 1.442695
    %v30 = vpow.pop %v29
    %v31 = vadd.f32 %v28, 2.0
    %v32 = vadd.f32 %v30, 2.0
    %v33 = vmul.f32 %v28, %v31
    %v34 = vmul.f32 %v30, %v32
    %v35 = vadd.f32 %v33, 2.0
    %v36 = vadd.f32 %v34, 2.0
    %v37 = vrcp.pop %v35
    %v38 = vrcp.pop %v36
    %v39 = vmul.f32 %v35, %v37
    %v40 = vmul.f32 %v36, %v38
    %v41 = vsub.f32 2.0, %v39
    %v42 = vsub.f32 2.0, %v40
    %v43 = vmul.f32 %v37, %v41
    %v44 = vmul.f32 %v38, %v42
    %v45 = vmul.f32 %v23, %v33
    %v46 = vmul.f32 %v24, %v34
    %v47 = vmul.f32 %v45, %v43
    %v48 = vmul.f32 %v46, %v44
    %vm49 = vcmp.gt.f32.partialorder %v23, 20.0
    %vm50 = vcmp.gt.f32.partialorder %v24, 20.0
    %v51 = vsel %vm49, %v23, %v47
    %v52 = vsel %vm50, %v24, %v48
    %53 = vst [vmem:[#allocation5] sm:$0xff] %v51
    %54 = vst [vmem:[#allocation5 + $0x8] sm:$0xff] %v52
    // Predicated region
    $region10: #{tpu_custom_call.1} parent=1 // pred_check
      _
    $region11: #{tpu_custom_call.1} parent=1 // pred_check_branch
      %56 = sbr.rel (0) target = $region13
    $region12: #{tpu_custom_call.1} parent=1 // pred_region
      %s58 = ssub.s32 256, 256
      %59 = vsyncadd [#allocation4], %s58
      %s60 = sshll.u32 [#allocation5], 4
      %s61 = int_to_ptr.vmem [resolvable:$true] %s60
      %66 = dma.vmem_to_hbm [thread:$0]  %s61, 256, %s1, [#allocation4], 128, 128, 8
    $region13: #{tpu_custom_call.1} parent=1 // pred_fallthru
      _
    // Predicated region
    $region14: #{tpu_custom_call.1} parent=1 // pred_check
      _
    $region15: #{tpu_custom_call.1} parent=1 // pred_check_branch
      %68 = sbr.rel (0) target = $region17
    $region16: #{tpu_custom_call.1} parent=1 // pred_region
      %69 = dma.done [#allocation4], 256
    $region17: #{tpu_custom_call.1} parent=1 // pred_fallthru
      _
    %70 = vsyncpa [#allocation3], 1
    %71 = vsyncpa [#allocation4], 1

</llo_original>
